<compile_context>
chip_gen: v7x
topology: tpu7x:2x2x1
jax: 0.10.0
libtpu: 0.0.40
codegen_flags: <defaults>
</compile_context>

<pallas_src>
import functools

import jax
import jax.numpy as jnp
from jax import lax
from jax.experimental import pallas as pl
from jax.experimental.pallas import tpu as pltpu

LANES = 512            # lane dimension of the 2-D view / block (multiple of 128)
MAX_BLOCK_ROWS = 512   # sublane dimension cap of a block (multiple of 8)


def _round_up(x, m):
    return ((x + m - 1) // m) * m


def _wbce_reduce_kernel(x_ref, t_ref, out_ref,
                        acc_pos, acc_neg, acc_spos, acc_sneg,
                        *, per_split, block_rows, groups,
                        mask_mode, n_valid, rows_total):
    """Accumulates pos count, neg count, sum(bce|pos), sum(bce|neg) into small
    (<=8, LANES) f32 VMEM scratch; reduces + stores one lane-dense (8,128)
    output block at the end of the chunk axis."""
    i = pl.program_id(0)            # core-split axis ("parallel")
    j = pl.program_id(1)            # chunk axis ("arbitrary", reduction)
    nj = pl.num_programs(1)

    @pl.when(j == 0)
    def _init():
        acc_pos[...] = jnp.zeros_like(acc_pos)
        acc_neg[...] = jnp.zeros_like(acc_neg)
        acc_spos[...] = jnp.zeros_like(acc_spos)
        acc_sneg[...] = jnp.zeros_like(acc_sneg)
        out_ref[...] = jnp.zeros_like(out_ref)

    x = x_ref[...].astype(jnp.float32)
    t = t_ref[...].astype(jnp.float32)

    # Statically-selected masking (only emitted when actually needed).  Only
    # the target needs masking: a sentinel value (-1) is neither 0 nor 1, so
    # masked elements contribute nothing to any of the four accumulators.
    blk = i * per_split + j
    if mask_mode == "elem":
        r = lax.broadcasted_iota(jnp.int32, x.shape, 0)
        c = lax.broadcasted_iota(jnp.int32, x.shape, 1)
        lim = n_valid - blk * (block_rows * LANES)
        t = jnp.where(r * LANES + c < lim, t, -1.0)
    elif mask_mode == "row":
        r = lax.broadcasted_iota(jnp.int32, x.shape, 0)
        lim = rows_total - blk * block_rows
        t = jnp.where(r < lim, t, -1.0)

    pos_b = t == 1.0
    neg_b = t == 0.0

    # Numerically stable binary_cross_entropy_with_logits (elementwise, unweighted):
    #   bce = max(x, 0) - x * t + log(1 + exp(-|x|))
    bce = jnp.maximum(x, 0.0) - x * t + jnp.log(1.0 + jnp.exp(-jnp.abs(x)))

    def _fold(v):
        # Partial reduction of (block_rows, LANES) -> (8, LANES) using a
        # pairwise add tree of sublane-aligned slices (pure VALU, no XLU).
        if groups <= 1:
            return v
        parts = [v[8 * g:8 * (g + 1), :] for g in range(groups)]
        while len(parts) > 1:
            nxt = [parts[a] + parts[a + 1] for a in range(0, len(parts) - 1, 2)]
            if len(parts) % 2:
                nxt.append(parts[-1])
            parts = nxt
        return parts[0]

    acc_pos[...] += _fold(pos_b.astype(jnp.float32))
    acc_neg[...] += _fold(neg_b.astype(jnp.float32))
    acc_spos[...] += _fold(jnp.where(pos_b, bce, 0.0))
    acc_sneg[...] += _fold(jnp.where(neg_b, bce, 0.0))

    @pl.when(j == nj - 1)
    def _finalize():
        p = jnp.sum(acc_pos[...], keepdims=True)
        ng = jnp.sum(acc_neg[...], keepdims=True)
        sp = jnp.sum(acc_spos[...], keepdims=True)
        sn = jnp.sum(acc_sneg[...], keepdims=True)
        rid = lax.broadcasted_iota(jnp.int32, out_ref.shape, 0)
        out_ref[...] = jnp.where(
            rid == 0, p,
            jnp.where(rid == 1, ng,
                      jnp.where(rid == 2, sp,
                                jnp.where(rid == 3, sn, 0.0))))


def _wbce_reductions(x_flat, t_flat):
    """x_flat, t_flat: 1-D arrays of equal length n (any float/int/bool dtype).
       Returns (pos_num, neg_num, sum_bce_pos, sum_bce_neg) as f32 scalars."""
    n_valid = x_flat.shape[0]
    n = n_valid

    # Host-side pad (a copy) only when the flat length is not a multiple of
    # LANES; the pad values are irrelevant because the kernel then masks by
    # true element index ("elem" mode).
    padded = (n % LANES) != 0
    if padded:
        n_pad = _round_up(n, 8 * LANES)
        x_flat = jnp.pad(x_flat, (0, n_pad - n))
        t_flat = jnp.pad(t_flat, (0, n_pad - n))
        n = n_pad

    rows = n // LANES

    # Block-row selection.  Nudge the block count to an even number (smaller
    # blocks) so the 2-way core split is available on v7x; partial last blocks
    # are handled by the cheap in-kernel row mask.
    if rows <= MAX_BLOCK_ROWS:
        block_rows, total_blocks = rows, 1
    else:
        block_rows = MAX_BLOCK_ROWS
        total_blocks = pl.cdiv(rows, block_rows)
        if total_blocks % 2 == 1:
            br2 = _round_up(pl.cdiv(rows, total_blocks + 1), 8)
            tb2 = pl.cdiv(rows, br2)
            if tb2 % 2 == 0:
                block_rows, total_blocks = br2, tb2

    if total_blocks >= 2 and total_blocks % 2 == 0:
        splits, per_split = 2, total_blocks // 2
    else:
        splits, per_split = 1, total_blocks

    if padded:
        mask_mode = "elem"
    elif rows % block_rows != 0:
        mask_mode = "row"
    else:
        mask_mode = "none"

    if block_rows >= 8 and block_rows % 8 == 0:
        groups, acc_rows = block_rows // 8, 8
    else:
        groups, acc_rows = 1, block_rows

    x2 = x_flat.reshape(rows, LANES)
    t2 = t_flat.reshape(rows, LANES)

    kernel = functools.partial(
        _wbce_reduce_kernel,
        per_split=per_split, block_rows=block_rows, groups=groups,
        mask_mode=mask_mode, n_valid=n_valid, rows_total=rows)

    grid_spec = pltpu.PrefetchScalarGridSpec(
        num_scalar_prefetch=0,
        grid=(splits, per_split),
        in_specs=[
            pl.BlockSpec((block_rows, LANES), lambda i, j: (i * per_split + j, 0)),
            pl.BlockSpec((block_rows, LANES), lambda i, j: (i * per_split + j, 0)),
        ],
        out_specs=pl.BlockSpec((8, 128), lambda i, j: (i, 0)),
        scratch_shapes=[pltpu.VMEM((acc_rows, LANES), jnp.float32)
                        for _ in range(4)],
    )

    out = pl.pallas_call(
        kernel,
        out_shape=jax.ShapeDtypeStruct((splits * 8, 128), jnp.float32),
        grid_spec=grid_spec,
        compiler_params=pltpu.CompilerParams(
            dimension_semantics=("parallel", "arbitrary")),
    )(x2, t2)

    partials = out.reshape(splits, 8, 128)[:, :4, 0]   # (splits, 4)
    sums = jnp.sum(partials, axis=0)                   # (4,)
    return sums[0], sums[1], sums[2], sums[3]


def bondary_loss(bd_pre, bd_gt, coeff_bce=20.0):
    """Pallas equivalent of BondaryLoss.forward(bd_pre, bd_gt)."""
    n, l, c, h, w = bd_pre.shape
    assert c == 1, "BondaryLoss expects a single boundary channel (C == 1)"
    # torch: bd_pre.permute(0,1,3,4,2).contiguous().view(1,-1) -- with C == 1
    # the permute is a pure no-op on the data, so flatten directly (no copy).
    log_p = bd_pre.reshape(-1)
    target_t = bd_gt.reshape(-1)
    assert log_p.shape[0] == target_t.shape[0], "bd_pre / bd_gt element counts must match"
    n_elems = log_p.shape[0]

    pos_num, neg_num, s_pos, s_neg = _wbce_reductions(log_p, target_t)

    sum_num = pos_num + neg_num
    safe = jnp.maximum(sum_num, 1.0)
    w_pos = jnp.where(sum_num > 0, neg_num / safe, 0.0)   # weight where target == 1
    w_neg = jnp.where(sum_num > 0, pos_num / safe, 0.0)   # weight where target == 0
    mean_loss = (w_pos * s_pos + w_neg * s_neg) / jnp.float32(n_elems)
    return jnp.float32(coeff_bce) * mean_loss


def ref_bondary_loss(bd_pre, bd_gt, coeff_bce=20.0):
    """Pure-JAX reference mirroring the PyTorch code exactly."""
    log_p = jnp.transpose(bd_pre, (0, 1, 3, 4, 2)).reshape(1, -1).astype(jnp.float32)
    target_t = bd_gt.reshape(1, -1).astype(jnp.float32)
    pos = target_t == 1
    neg = target_t == 0
    pos_num = jnp.sum(pos).astype(jnp.float32)
    neg_num = jnp.sum(neg).astype(jnp.float32)
    sum_num = pos_num + neg_num
    weight = jnp.where(pos, neg_num / sum_num, jnp.where(neg, pos_num / sum_num, 0.0))
    x, t = log_p, target_t
    bce = jnp.maximum(x, 0.0) - x * t + jnp.log(1.0 + jnp.exp(-jnp.abs(x)))
    return coeff_bce * jnp.mean(weight * bce)


if __name__ == "__main__":
    key = jax.random.PRNGKey(0)
    k1, k2, k3, k4, k5, k6 = jax.random.split(key, 6)

    # Test 1: aligned length -> no padding, single full block, no mask.
    n, l, c, h, w = 2, 4, 1, 16, 16
    bd_pre = jax.random.normal(k1, (n, l, c, h, w), dtype=jnp.float32)
    bd_gt = (jax.random.uniform(k2, (n, l, h, w)) < 0.3).astype(jnp.float32)
    out = jax.block_until_ready(bondary_loss(bd_pre, bd_gt))
    ref = jax.block_until_ready(ref_bondary_loss(bd_pre, bd_gt))
    assert jnp.allclose(out, ref, rtol=1e-5, atol=1e-6), (float(out), float(ref))

    # Test 2: ragged length -> host pad + in-kernel element mask; int targets.
    n, l, c, h, w = 1, 3, 1, 17, 19
    bd_pre = jax.random.normal(k3, (n, l, c, h, w), dtype=jnp.float32)
    bd_gt = (jax.random.uniform(k4, (n, l, h, w)) < 0.5).astype(jnp.int32)
    out = jax.block_until_ready(bondary_loss(bd_pre, bd_gt))
    ref = jax.block_until_ready(ref_bondary_loss(bd_pre, bd_gt))
    assert jnp.allclose(out, ref, rtol=1e-5, atol=1e-6), (float(out), float(ref))

    # Test 3: multi-block path -> 2-way core split + partial-row mask + fold.
    n, l, c, h, w = 2, 2, 1, 256, 320
    bd_pre = jax.random.normal(k5, (n, l, c, h, w), dtype=jnp.float32)
    bd_gt = (jax.random.uniform(k6, (n, l, h, w)) < 0.3).astype(jnp.float32)
    out = jax.block_until_ready(bondary_loss(bd_pre, bd_gt))
    ref = jax.block_until_ready(ref_bondary_loss(bd_pre, bd_gt))
    assert jnp.allclose(out, ref, rtol=1e-4, atol=1e-6), (float(out), float(ref))

    print("KERNEL_OK")
</pallas_src>

<mosaic_0001>
module attributes {stable_mosaic.version = 11 : i64} {
  func.func @_wbce_reduce_kernel(%arg0: i32, %arg1: i32, %arg2: memref<4x512xf32, #tpu.memory_space<vmem>>, %arg3: memref<4x512xf32, #tpu.memory_space<vmem>>, %arg4: memref<8x128xf32, #tpu.memory_space<vmem>>, %arg5: memref<4x512xf32, #tpu.memory_space<vmem>>, %arg6: memref<4x512xf32, #tpu.memory_space<vmem>>, %arg7: memref<4x512xf32, #tpu.memory_space<vmem>>, %arg8: memref<4x512xf32, #tpu.memory_space<vmem>>) attributes {dimension_semantics = [#tpu.dimension_semantics<parallel>, #tpu.dimension_semantics<arbitrary>], iteration_bounds = array<i64: 1, 1>, scalar_prefetch = 0 : i64, scratch_operands = 4 : i64, tpu.core_type = #tpu.core_type<tc>, window_params = [{transform_indices = @transform_0, window_bounds = array<i64: 4, 512>}, {transform_indices = @transform_1, window_bounds = array<i64: 4, 512>}, {transform_indices = @transform_2, window_bounds = array<i64: 8, 128>}]} {
    %c0_i32 = arith.constant 0 : i32
    %0 = arith.cmpi eq, %arg1, %c0_i32 : i32
    %1 = arith.extui %0 : i1 to i32
    %c0_i32_0 = arith.constant 0 : i32
    %2 = arith.cmpi ne, %1, %c0_i32_0 : i32
    scf.if %2 {
      %cst_28 = arith.constant 0.000000e+00 : f32
      %44 = vector.broadcast %cst_28 : f32 to vector<4x512xf32>
      %c0_29 = arith.constant 0 : index
      %c0_30 = arith.constant 0 : index
      %45 = vector.load %arg5[%c0_29, %c0_30] : memref<4x512xf32, #tpu.memory_space<vmem>>, vector<4x512xf32>
      tpu.vector_store %arg5[%c0_29, %c0_30], %44 {strides = array<i32>} : memref<4x512xf32, #tpu.memory_space<vmem>>, vector<4x512xf32>,
      %cst_31 = arith.constant 0.000000e+00 : f32
      %46 = vector.broadcast %cst_31 : f32 to vector<4x512xf32>
      %c0_32 = arith.constant 0 : index
      %c0_33 = arith.constant 0 : index
      %47 = vector.load %arg6[%c0_32, %c0_33] : memref<4x512xf32, #tpu.memory_space<vmem>>, vector<4x512xf32>
      tpu.vector_store %arg6[%c0_32, %c0_33], %46 {strides = array<i32>} : memref<4x512xf32, #tpu.memory_space<vmem>>, vector<4x512xf32>,
      %cst_34 = arith.constant 0.000000e+00 : f32
      %48 = vector.broadcast %cst_34 : f32 to vector<4x512xf32>
      %c0_35 = arith.constant 0 : index
      %c0_36 = arith.constant 0 : index
      %49 = vector.load %arg7[%c0_35, %c0_36] : memref<4x512xf32, #tpu.memory_space<vmem>>, vector<4x512xf32>
      tpu.vector_store %arg7[%c0_35, %c0_36], %48 {strides = array<i32>} : memref<4x512xf32, #tpu.memory_space<vmem>>, vector<4x512xf32>,
      %cst_37 = arith.constant 0.000000e+00 : f32
      %50 = vector.broadcast %cst_37 : f32 to vector<4x512xf32>
      %c0_38 = arith.constant 0 : index
      %c0_39 = arith.constant 0 : index
      %51 = vector.load %arg8[%c0_38, %c0_39] : memref<4x512xf32, #tpu.memory_space<vmem>>, vector<4x512xf32>
      tpu.vector_store %arg8[%c0_38, %c0_39], %50 {strides = array<i32>} : memref<4x512xf32, #tpu.memory_space<vmem>>, vector<4x512xf32>,
      %cst_40 = arith.constant 0.000000e+00 : f32
      %52 = vector.broadcast %cst_40 : f32 to vector<8x128xf32>
      %c0_41 = arith.constant 0 : index
      %c0_42 = arith.constant 0 : index
      %53 = vector.load %arg4[%c0_41, %c0_42] : memref<8x128xf32, #tpu.memory_space<vmem>>, vector<8x128xf32>
      tpu.vector_store %arg4[%c0_41, %c0_42], %52 {strides = array<i32>} : memref<8x128xf32, #tpu.memory_space<vmem>>, vector<8x128xf32>,
    } else {
    }
    %c0 = arith.constant 0 : index
    %c0_1 = arith.constant 0 : index
    %3 = vector.load %arg2[%c0, %c0_1] : memref<4x512xf32, #tpu.memory_space<vmem>>, vector<4x512xf32>
    %c0_2 = arith.constant 0 : index
    %c0_3 = arith.constant 0 : index
    %4 = vector.load %arg3[%c0_2, %c0_3] : memref<4x512xf32, #tpu.memory_space<vmem>>, vector<4x512xf32>
    %cst = arith.constant 1.000000e+00 : f32
    %5 = vector.broadcast %cst : f32 to vector<4x512xf32>
    %6 = arith.cmpf oeq, %4, %5 : vector<4x512xf32>
    %cst_4 = arith.constant 0.000000e+00 : f32
    %7 = vector.broadcast %cst_4 : f32 to vector<4x512xf32>
    %8 = arith.cmpf oeq, %4, %7 : vector<4x512xf32>
    %cst_5 = arith.constant 0.000000e+00 : f32
    %9 = vector.broadcast %cst_5 : f32 to vector<4x512xf32>
    %10 = arith.maximumf %3, %9 : vector<4x512xf32>
    %11 = arith.mulf %3, %4 : vector<4x512xf32>
    %12 = arith.subf %10, %11 : vector<4x512xf32>
    %13 = math.absf %3 : vector<4x512xf32>
    %cst_6 = arith.constant 0.000000e+00 : f32
    %14 = vector.broadcast %cst_6 : f32 to vector<4x512xf32>
    %15 = arith.subf %14, %13 : vector<4x512xf32>
    %16 = math.exp %15 : vector<4x512xf32>
    %cst_7 = arith.constant 1.000000e+00 : f32
    %17 = vector.broadcast %cst_7 : f32 to vector<4x512xf32>
    %18 = arith.addf %17, %16 : vector<4x512xf32>
    %19 = math.log %18 : vector<4x512xf32>
    %20 = arith.addf %12, %19 : vector<4x512xf32>
    %c0_8 = arith.constant 0 : index
    %c0_9 = arith.constant 0 : index
    %21 = vector.load %arg5[%c0_8, %c0_9] : memref<4x512xf32, #tpu.memory_space<vmem>>, vector<4x512xf32>
    %22 = arith.extui %6 : vector<4x512xi1> to vector<4x512xi32>
    %23 = arith.sitofp %22 : vector<4x512xi32> to vector<4x512xf32>
    %24 = arith.addf %21, %23 : vector<4x512xf32>
    %c0_10 = arith.constant 0 : index
    %c0_11 = arith.constant 0 : index
    %25 = vector.load %arg5[%c0_10, %c0_11] : memref<4x512xf32, #tpu.memory_space<vmem>>, vector<4x512xf32>
    tpu.vector_store %arg5[%c0_10, %c0_11], %24 {strides = array<i32>} : memref<4x512xf32, #tpu.memory_space<vmem>>, vector<4x512xf32>,
    %c0_12 = arith.constant 0 : index
    %c0_13 = arith.constant 0 : index
    %26 = vector.load %arg6[%c0_12, %c0_13] : memref<4x512xf32, #tpu.memory_space<vmem>>, vector<4x512xf32>
    %27 = arith.extui %8 : vector<4x512xi1> to vector<4x512xi32>
    %28 = arith.sitofp %27 : vector<4x512xi32> to vector<4x512xf32>
    %29 = arith.addf %26, %28 : vector<4x512xf32>
    %c0_14 = arith.constant 0 : index
    %c0_15 = arith.constant 0 : index
    %30 = vector.load %arg6[%c0_14, %c0_15] : memref<4x512xf32, #tpu.memory_space<vmem>>, vector<4x512xf32>
    tpu.vector_store %arg6[%c0_14, %c0_15], %29 {strides = array<i32>} : memref<4x512xf32, #tpu.memory_space<vmem>>, vector<4x512xf32>,
    %c0_16 = arith.constant 0 : index
    %c0_17 = arith.constant 0 : index
    %31 = vector.load %arg7[%c0_16, %c0_17] : memref<4x512xf32, #tpu.memory_space<vmem>>, vector<4x512xf32>
    %cst_18 = arith.constant 0.000000e+00 : f32
    %32 = vector.broadcast %cst_18 : f32 to vector<4x512xf32>
    %33 = arith.select %6, %20, %32 : vector<4x512xi1>, vector<4x512xf32>
    %34 = arith.addf %31, %33 : vector<4x512xf32>
    %c0_19 = arith.constant 0 : index
    %c0_20 = arith.constant 0 : index
    %35 = vector.load %arg7[%c0_19, %c0_20] : memref<4x512xf32, #tpu.memory_space<vmem>>, vector<4x512xf32>
    tpu.vector_store %arg7[%c0_19, %c0_20], %34 {strides = array<i32>} : memref<4x512xf32, #tpu.memory_space<vmem>>, vector<4x512xf32>,
    %c0_21 = arith.constant 0 : index
    %c0_22 = arith.constant 0 : index
    %36 = vector.load %arg8[%c0_21, %c0_22] : memref<4x512xf32, #tpu.memory_space<vmem>>, vector<4x512xf32>
    %cst_23 = arith.constant 0.000000e+00 : f32
    %37 = vector.broadcast %cst_23 : f32 to vector<4x512xf32>
    %38 = arith.select %8, %20, %37 : vector<4x512xi1>, vector<4x512xf32>
    %39 = arith.addf %36, %38 : vector<4x512xf32>
    %c0_24 = arith.constant 0 : index
    %c0_25 = arith.constant 0 : index
    %40 = vector.load %arg8[%c0_24, %c0_25] : memref<4x512xf32, #tpu.memory_space<vmem>>, vector<4x512xf32>
    tpu.vector_store %arg8[%c0_24, %c0_25], %39 {strides = array<i32>} : memref<4x512xf32, #tpu.memory_space<vmem>>, vector<4x512xf32>,
    %c0_i32_26 = arith.constant 0 : i32
    %41 = arith.cmpi eq, %arg1, %c0_i32_26 : i32
    %42 = arith.extui %41 : i1 to i32
    %c0_i32_27 = arith.constant 0 : i32
    %43 = arith.cmpi ne, %42, %c0_i32_27 : i32
    scf.if %43 {
      %c0_28 = arith.constant 0 : index
      %c0_29 = arith.constant 0 : index
      %44 = vector.load %arg5[%c0_28, %c0_29] : memref<4x512xf32, #tpu.memory_space<vmem>>, vector<4x512xf32>
      %45 = vector.shape_cast %44 : vector<4x512xf32> to vector<1x4x512xf32>
      %cst_30 = arith.constant dense<0.000000e+00> : vector<1xf32>
      %46 = vector.multi_reduction <add>, %45, %cst_30 [1, 2] : vector<1x4x512xf32> to vector<1xf32>
      %47 = vector.shape_cast %46 : vector<1xf32> to vector<1x1x1xf32>
      %48 = vector.extract %47[0, 0, 0] : f32 from vector<1x1x1xf32>
      %49 = vector.broadcast %48 : f32 to vector<1x1xf32>
      %c0_31 = arith.constant 0 : index
      %c0_32 = arith.constant 0 : index
      %50 = vector.load %arg6[%c0_31, %c0_32] : memref<4x512xf32, #tpu.memory_space<vmem>>, vector<4x512xf32>
      %51 = vector.shape_cast %50 : vector<4x512xf32> to vector<1x4x512xf32>
      %cst_33 = arith.constant dense<0.000000e+00> : vector<1xf32>
      %52 = vector.multi_reduction <add>, %51, %cst_33 [1, 2] : vector<1x4x512xf32> to vector<1xf32>
      %53 = vector.shape_cast %52 : vector<1xf32> to vector<1x1x1xf32>
      %54 = vector.extract %53[0, 0, 0] : f32 from vector<1x1x1xf32>
      %55 = vector.broadcast %54 : f32 to vector<1x1xf32>
      %c0_34 = arith.constant 0 : index
      %c0_35 = arith.constant 0 : index
      %56 = vector.load %arg7[%c0_34, %c0_35] : memref<4x512xf32, #tpu.memory_space<vmem>>, vector<4x512xf32>
      %57 = vector.shape_cast %56 : vector<4x512xf32> to vector<1x4x512xf32>
      %cst_36 = arith.constant dense<0.000000e+00> : vector<1xf32>
      %58 = vector.multi_reduction <add>, %57, %cst_36 [1, 2] : vector<1x4x512xf32> to vector<1xf32>
      %59 = vector.shape_cast %58 : vector<1xf32> to vector<1x1x1xf32>
      %60 = vector.extract %59[0, 0, 0] : f32 from vector<1x1x1xf32>
      %61 = vector.broadcast %60 : f32 to vector<1x1xf32>
      %c0_37 = arith.constant 0 : index
      %c0_38 = arith.constant 0 : index
      %62 = vector.load %arg8[%c0_37, %c0_38] : memref<4x512xf32, #tpu.memory_space<vmem>>, vector<4x512xf32>
      %63 = vector.shape_cast %62 : vector<4x512xf32> to vector<1x4x512xf32>
      %cst_39 = arith.constant dense<0.000000e+00> : vector<1xf32>
      %64 = vector.multi_reduction <add>, %63, %cst_39 [1, 2] : vector<1x4x512xf32> to vector<1xf32>
      %65 = vector.shape_cast %64 : vector<1xf32> to vector<1x1x1xf32>
      %66 = vector.extract %65[0, 0, 0] : f32 from vector<1x1x1xf32>
      %67 = vector.broadcast %66 : f32 to vector<1x1xf32>
      %68 = tpu.iota {dimensions = array<i32: 0>} : vector<8x128xi32>
      %c0_i32_40 = arith.constant 0 : i32
      %69 = vector.broadcast %c0_i32_40 : i32 to vector<8x128xi32>
      %70 = arith.cmpi eq, %68, %69 : vector<8x128xi32>
      %c1_i32 = arith.constant 1 : i32
      %71 = vector.broadcast %c1_i32 : i32 to vector<8x128xi32>
      %72 = arith.cmpi eq, %68, %71 : vector<8x128xi32>
      %c2_i32 = arith.constant 2 : i32
      %73 = vector.broadcast %c2_i32 : i32 to vector<8x128xi32>
      %74 = arith.cmpi eq, %68, %73 : vector<8x128xi32>
      %c3_i32 = arith.constant 3 : i32
      %75 = vector.broadcast %c3_i32 : i32 to vector<8x128xi32>
      %76 = arith.cmpi eq, %68, %75 : vector<8x128xi32>
      %cst_41 = arith.constant 0.000000e+00 : f32
      %77 = vector.shape_cast %67 : vector<1x1xf32> to vector<1x1xf32>
      %78 = vector.broadcast %77 : vector<1x1xf32> to vector<8x128xf32>
      %79 = vector.broadcast %cst_41 : f32 to vector<8x128xf32>
      %80 = arith.select %76, %78, %79 : vector<8x128xi1>, vector<8x128xf32>
      %81 = vector.shape_cast %61 : vector<1x1xf32> to vector<1x1xf32>
      %82 = vector.broadcast %81 : vector<1x1xf32> to vector<8x128xf32>
      %83 = arith.select %74, %82, %80 : vector<8x128xi1>, vector<8x128xf32>
      %84 = vector.shape_cast %55 : vector<1x1xf32> to vector<1x1xf32>
      %85 = vector.broadcast %84 : vector<1x1xf32> to vector<8x128xf32>
      %86 = arith.select %72, %85, %83 : vector<8x128xi1>, vector<8x128xf32>
      %87 = vector.shape_cast %49 : vector<1x1xf32> to vector<1x1xf32>
      %88 = vector.broadcast %87 : vector<1x1xf32> to vector<8x128xf32>
      %89 = arith.select %70, %88, %86 : vector<8x128xi1>, vector<8x128xf32>
      %c0_42 = arith.constant 0 : index
      %c0_43 = arith.constant 0 : index
      %90 = vector.load %arg4[%c0_42, %c0_43] : memref<8x128xf32, #tpu.memory_space<vmem>>, vector<8x128xf32>
      tpu.vector_store %arg4[%c0_42, %c0_43], %89 {strides = array<i32>} : memref<8x128xf32, #tpu.memory_space<vmem>>, vector<8x128xf32>,
    } else {
    }
    return
  }
  func.func @transform_0(%arg0: i32, %arg1: i32) -> (i32, i32) {
    %c1_i32 = arith.constant 1 : i32
    %0 = arith.muli %arg0, %c1_i32 : i32
    %1 = arith.addi %0, %arg1 : i32
    %c0_i32 = arith.constant 0 : i32
    %c0_i32_0 = arith.constant 0 : i32
    return %1, %c0_i32 : i32, i32
  }
  func.func @transform_1(%arg0: i32, %arg1: i32) -> (i32, i32) {
    %c1_i32 = arith.constant 1 : i32
    %0 = arith.muli %arg0, %c1_i32 : i32
    %1 = arith.addi %0, %arg1 : i32
    %c0_i32 = arith.constant 0 : i32
    %c0_i32_0 = arith.constant 0 : i32
    return %1, %c0_i32 : i32, i32
  }
  func.func @transform_2(%arg0: i32, %arg1: i32) -> (i32, i32) {
    %c0_i32 = arith.constant 0 : i32
    %c0_i32_0 = arith.constant 0 : i32
    return %arg0, %c0_i32 : i32, i32
  }
}

</mosaic_0001>

<llo_original>
// kernel: tpu_custom_call.1
$region0: #{tpu_custom_call.1}
  #allocation0 [shape = 'u32[]', space=smem, size = 0x4, offset = 0x4, fixed_abs, tag = 'smem constant byte address 0x4 - core index']
  #allocation1 [shape = 'u32[144,128]{1,0:T(1,128)}', space=vmem, size = 0x12000, scoped, tag = 'internal scratch']
  #allocation2 [shape = 'f32[4,512]{1,0:T(4,128)}', space=vmem, size = 0x2000, scoped, tag = 'scratch operand']
  #allocation3 [shape = 'f32[4,512]{1,0:T(4,128)}', space=vmem, size = 0x2000, scoped, tag = 'scratch operand']
  #allocation4 [shape = 'f32[4,512]{1,0:T(4,128)}', space=vmem, size = 0x2000, scoped, tag = 'scratch operand']
  #allocation5 [shape = 'f32[4,512]{1,0:T(4,128)}', space=vmem, size = 0x2000, scoped, tag = 'scratch operand']
  %s0 = inlined_call_operand.hbm [shape: f32[4,512], index: 0, kind: input, shape index: {}]
  %s1 = inlined_call_operand.hbm [shape: f32[4,512], index: 1, kind: input, shape index: {}]
  %s2 = inlined_call_operand.hbm [shape: f32[8,128], index: 2, kind: output, shape index: {}]
  %s3 = sld [smem:[#allocation0]]
  $region34: #{tpu_custom_call.1} parent=0
    _
  %s5 = ssub.s32 1, %s3
  %s6 = scalar_select 0, %s5, %s3
  $region1: #{tpu_custom_call.1} parent=0
    #allocation6 [shape = 'u8[8192]{0}', space=vmem, size = 0x2000, scoped, tag = 'input window, operand 0, single buffered']
    #allocation7 [shape = 's32[1]{0}', space=sflag, size = 0x4, scoped, tag = 'scoped memory for tpu_custom_call.1']
    #allocation8 [shape = 's32[1]{0}', space=sflag, size = 0x4, scoped, tag = 'scoped memory for tpu_custom_call.1']
    #allocation9 [shape = 'u8[8192]{0}', space=vmem, size = 0x2000, scoped, tag = 'input window, operand 1, single buffered']
    #allocation10 [shape = 's32[1]{0}', space=sflag, size = 0x4, scoped, tag = 'scoped memory for tpu_custom_call.1']
    #allocation11 [shape = 'u8[4096]{0}', space=vmem, size = 0x1000, scoped, tag = 'output window, operand 0, single buffered']
    %7 = vsyncpa [#allocation7], 0
    %8 = vsyncpa [#allocation10], 0
    %9 = vsyncpa [#allocation8], 0
    // Predicated region
    $region2: #{tpu_custom_call.1} parent=1 // pred_check
      _
    $region3: #{tpu_custom_call.1} parent=1 // pred_check_branch
      %11 = sbr.rel (0) target = $region5
    $region4: #{tpu_custom_call.1} parent=1 // pred_region
      %s12 = sadd.s32 0, 0
      %s14 = ssub.s32 256, 256
      %15 = vsyncadd [#allocation7], %s14
      %s16 = smul.addr %s12, 4
      %s17 = smul.addr %s16, 64
      %s18 = scalar_lea.hbm %s0, %s17
      %s20 = sshll.u32 [#allocation6], 4
      %s21 = int_to_ptr.vmem [resolvable:$true] %s20
      %23 = dma.hbm_to_vmem [thread:$0]  %s18, 256, %s21, [#allocation7]
    $region5: #{tpu_custom_call.1} parent=1 // pred_fallthru
      _
    // Predicated region
    $region6: #{tpu_custom_call.1} parent=1 // pred_check
      _
    $region7: #{tpu_custom_call.1} parent=1 // pred_check_branch
      %25 = sbr.rel (0) target = $region9
    $region8: #{tpu_custom_call.1} parent=1 // pred_region
      %s26 = sadd.s32 0, 0
      %s28 = ssub.s32 256, 256
      %29 = vsyncadd [#allocation10], %s28
      %s30 = smul.addr %s26, 4
      %s31 = smul.addr %s30, 64
      %s32 = scalar_lea.hbm %s1, %s31
      %s34 = sshll.u32 [#allocation9], 4
      %s35 = int_to_ptr.vmem [resolvable:$true] %s34
      %37 = dma.hbm_to_vmem [thread:$0]  %s32, 256, %s35, [#allocation10]
    $region9: #{tpu_custom_call.1} parent=1 // pred_fallthru
      _
    // Predicated region
    $region10: #{tpu_custom_call.1} parent=1 // pred_check
      _
    $region11: #{tpu_custom_call.1} parent=1 // pred_check_branch
      %39 = sbr.rel (0) target = $region13
    $region12: #{tpu_custom_call.1} parent=1 // pred_region
      %40 = dma.done [#allocation7], 256
    $region13: #{tpu_custom_call.1} parent=1 // pred_fallthru
      _
    // Predicated region
    $region14: #{tpu_custom_call.1} parent=1 // pred_check
      _
    $region15: #{tpu_custom_call.1} parent=1 // pred_check_branch
      %42 = sbr.rel (0) target = $region17
    $region16: #{tpu_custom_call.1} parent=1 // pred_region
      %43 = dma.done [#allocation10], 256
    $region17: #{tpu_custom_call.1} parent=1 // pred_fallthru
      _
    %s44 = sadd.s32 0, 0
    %s45 = sadd.s32 0, 0
    %p46 = scmp.eq.s32.totalorder 0, 0
    // Predicated region
    $region18: #{tpu_custom_call.1} parent=1 // pred_check
      %p47 = pneg %p46
    $region19: #{tpu_custom_call.1} parent=1 // pred_check_branch
      %49 = sbr.rel (%p47) target = $region21
    $region20: #{tpu_custom_call.1} parent=1 // pred_region
      %50 = vst [vmem:[#allocation2] sm:$0xff] 0.0
      %51 = vst [vmem:[#allocation2 + $0x8] sm:$0xff] 0.0
      %52 = vst [vmem:[#allocation3] sm:$0xff] 0.0
      %53 = vst [vmem:[#allocation3 + $0x8] sm:$0xff] 0.0
      %54 = vst [vmem:[#allocation4] sm:$0xff] 0.0
      %55 = vst [vmem:[#allocation4 + $0x8] sm:$0xff] 0.0
      %56 = vst [vmem:[#allocation5] sm:$0xff] 0.0
      %57 = vst [vmem:[#allocation5 + $0x8] sm:$0xff] 0.0
      %58 = vst [vmem:[#allocation11] sm:$0xff] 0.0
    $region21: #{tpu_custom_call.1} parent=1 // pred_fallthru
      _
    %v59 = vld [vmem:[#allocation6] sm:$0xff]
    %v60 = vld [vmem:[#allocation6 + $0x8] sm:$0xff]
    %v61 = vld [vmem:[#allocation9] sm:$0xff]
    %v62 = vld [vmem:[#allocation9 + $0x8] sm:$0xff]
    %vm63 = vcmp.eq.f32.partialorder %v61, 1.0
    %vm64 = vcmp.eq.f32.partialorder %v62, 1.0
    %vm65 = vcmp.eq.f32.partialorder %v61, 0.0
    %vm66 = vcmp.eq.f32.partialorder %v62, 0.0
    %v67 = vmax.f32 %v59, 0.0
    %v68 = vmax.f32 %v60, 0.0
    %v69 = vmul.f32 %v59, %v61
    %v70 = vmul.f32 %v60, %v62
    %v71 = vsub.f32 %v67, %v69
    %v72 = vsub.f32 %v68, %v70
    %v73 = vand.u32 2147483647, %v59
    %v74 = vand.u32 2147483647, %v60
    %v75 = vsub.f32 0.0, %v73
    %v76 = vsub.f32 0.0, %v74
    %v77 = vmul.f32 %v75, 1.442695
    %v78 = vpow.pop %v77
    %v79 = vmul.f32 %v76, 1.442695
    %v80 = vpow.pop %v79
    %v81 = vadd.f32 %v78, 1.0
    %v82 = vadd.f32 %v80, 1.0
    %v83 = vlog2.pop %v81
    %v84 = vmul.f32 %v83, 0.6931472
    %v85 = vlog2.pop %v82
    %v86 = vmul.f32 %v85, 0.6931472
    %v87 = vadd.f32 %v71, %v84
    %v88 = vadd.f32 %v72, %v86
    %v89 = vld [vmem:[#allocation2] sm:$0xff]
    %v90 = vld [vmem:[#allocation2 + $0x8] sm:$0xff]
    %v91 = vsel %vm63, 1, 0
    %v92 = vsel %vm64, 1, 0
    %v93 = vcvt.s32.f32 %v91
    %v94 = vcvt.s32.f32 %v92
    %v95 = vadd.f32 %v89, %v93
    %v96 = vadd.f32 %v90, %v94
    %97 = vst [vmem:[#allocation2] sm:$0xff] %v95
    %98 = vst [vmem:[#allocation2 + $0x8] sm:$0xff] %v96
    %v99 = vld [vmem:[#allocation3] sm:$0xff]
    %v100 = vld [vmem:[#allocation3 + $0x8] sm:$0xff]
    %v101 = vsel %vm65, 1, 0
    %v102 = vsel %vm66, 1, 0
    %v103 = vcvt.s32.f32 %v101
    %v104 = vcvt.s32.f32 %v102
    %v105 = vadd.f32 %v99, %v103
    %v106 = vadd.f32 %v100, %v104
    %107 = vst [vmem:[#allocation3] sm:$0xff] %v105
    %108 = vst [vmem:[#allocation3 + $0x8] sm:$0xff] %v106
    %v109 = vld [vmem:[#allocation4] sm:$0xff]
    %v110 = vld [vmem:[#allocation4 + $0x8] sm:$0xff]
    %v111 = vsel %vm63, %v87, 0.0
    %v112 = vsel %vm64, %v88, 0.0
    %v113 = vadd.f32 %v109, %v111
    %v114 = vadd.f32 %v110, %v112
    %115 = vst [vmem:[#allocation4] sm:$0xff] %v113
    %116 = vst [vmem:[#allocation4 + $0x8] sm:$0xff] %v114
    %v117 = vld [vmem:[#allocation5] sm:$0xff]
    %v118 = vld [vmem:[#allocation5 + $0x8] sm:$0xff]
    %v119 = vsel %vm65, %v87, 0.0
    %v120 = vsel %vm66, %v88, 0.0
    %v121 = vadd.f32 %v117, %v119
    %v122 = vadd.f32 %v118, %v120
    %123 = vst [vmem:[#allocation5] sm:$0xff] %v121
    %124 = vst [vmem:[#allocation5 + $0x8] sm:$0xff] %v122
    // Predicated region
    $region22: #{tpu_custom_call.1} parent=1 // pred_check
      %p125 = pneg %p46
    $region23: #{tpu_custom_call.1} parent=1 // pred_check_branch
      %127 = sbr.rel (%p125) target = $region25
    $region24: #{tpu_custom_call.1} parent=1 // pred_region
      %v128 = vld [vmem:[#allocation2] sm:$0xff]
      %v129 = vld [vmem:[#allocation2 + $0x8] sm:$0xff]
      %v132 = vcombine.high %v128, %v128
      %v133 = vcombine.high %v129, %v129
      %vm136 = vcmask 1043456
      %v137 = vsel %vm136, %v128, 0.0
      %v138 = vsel %vm136, %v132, 0.0
      %v139 = vadd.f32 %v137, %v138
      %v140 = vsel %vm136, %v129, 0.0
      %v141 = vadd.f32 %v139, %v140
      %v142 = vsel %vm136, %v133, 0.0
      %v143 = vadd.f32 %v141, %v142
      %144 = vadd.xlane.f32.xlu0 %v143
      %v145 = vpop.xlane.xlu0 %144
      %v146 = vrot.slane %v145, 4
      %v147 = vadd.f32 %v145, %v146
      %v148 = vrot.slane %v147, 2
      %v149 = vadd.f32 %v147, %v148
      %v150 = vrot.slane %v149, 1
      %v151 = vadd.f32 %v149, %v150
      %s152 = vtos %v151
      %v153 = vld [vmem:[#allocation3] sm:$0xff]
      %v154 = vld [vmem:[#allocation3 + $0x8] sm:$0xff]
      %v157 = vcombine.high %v153, %v153
      %v158 = vcombine.high %v154, %v154
      %v161 = vsel %vm136, %v153, 0.0
      %v162 = vsel %vm136, %v157, 0.0
      %v163 = vadd.f32 %v161, %v162
      %v164 = vsel %vm136, %v154, 0.0
      %v165 = vadd.f32 %v163, %v164
      %v166 = vsel %vm136, %v158, 0.0
      %v167 = vadd.f32 %v165, %v166
      %168 = vadd.xlane.f32.xlu0 %v167
      %v169 = vpop.xlane.xlu0 %168
      %v170 = vrot.slane %v169, 4
      %v171 = vadd.f32 %v169, %v170
      %v172 = vrot.slane %v171, 2
      %v173 = vadd.f32 %v171, %v172
      %v174 = vrot.slane %v173, 1
      %v175 = vadd.f32 %v173, %v174
      %s176 = vtos %v175
      %v177 = vld [vmem:[#allocation4] sm:$0xff]
      %v178 = vld [vmem:[#allocation4 + $0x8] sm:$0xff]
      %v181 = vcombine.high %v177, %v177
      %v182 = vcombine.high %v178, %v178
      %v185 = vsel %vm136, %v177, 0.0
      %v186 = vsel %vm136, %v181, 0.0
      %v187 = vadd.f32 %v185, %v186
      %v188 = vsel %vm136, %v178, 0.0
      %v189 = vadd.f32 %v187, %v188
      %v190 = vsel %vm136, %v182, 0.0
      %v191 = vadd.f32 %v189, %v190
      %192 = vadd.xlane.f32.xlu0 %v191
      %v193 = vpop.xlane.xlu0 %192
      %v194 = vrot.slane %v193, 4
      %v195 = vadd.f32 %v193, %v194
      %v196 = vrot.slane %v195, 2
      %v197 = vadd.f32 %v195, %v196
      %v198 = vrot.slane %v197, 1
      %v199 = vadd.f32 %v197, %v198
      %s200 = vtos %v199
      %v201 = vld [vmem:[#allocation5] sm:$0xff]
      %v202 = vld [vmem:[#allocation5 + $0x8] sm:$0xff]
      %v205 = vcombine.high %v201, %v201
      %v206 = vcombine.high %v202, %v202
      %v209 = vsel %vm136, %v201, 0.0
      %v210 = vsel %vm136, %v205, 0.0
      %v211 = vadd.f32 %v209, %v210
      %v212 = vsel %vm136, %v202, 0.0
      %v213 = vadd.f32 %v211, %v212
      %v214 = vsel %vm136, %v206, 0.0
      %v215 = vadd.f32 %v213, %v214
      %216 = vadd.xlane.f32.xlu0 %v215
      %v217 = vpop.xlane.xlu0 %216
      %v218 = vrot.slane %v217, 4
      %v219 = vadd.f32 %v217, %v218
      %v220 = vrot.slane %v219, 2
      %v221 = vadd.f32 %v219, %v220
      %v222 = vrot.slane %v221, 1
      %v223 = vadd.f32 %v221, %v222
      %s224 = vtos %v223
      %v225 = vlaneseq
      %v226 = vshrl.u32 %v225, 7
      %vm227 = vcmp.eq.s32.totalorder %v226, 0
      %vm228 = vcmp.eq.s32.totalorder %v226, 1
      %vm229 = vcmp.eq.s32.totalorder %v226, 2
      %vm230 = vcmp.eq.s32.totalorder %v226, 3
      %v231 = vstv %s224
      %v232 = vsel %vm230, %v231, 0.0
      %v233 = vstv %s200
      %v234 = vsel %vm229, %v233, %v232
      %v235 = vstv %s176
      %v236 = vsel %vm228, %v235, %v234
      %v237 = vstv %s152
      %v238 = vsel %vm227, %v237, %v236
      %239 = vst [vmem:[#allocation11] sm:$0xff] %v238
    $region25: #{tpu_custom_call.1} parent=1 // pred_fallthru
      _
    // Predicated region
    $region26: #{tpu_custom_call.1} parent=1 // pred_check
      _
    $region27: #{tpu_custom_call.1} parent=1 // pred_check_branch
      %241 = sbr.rel (0) target = $region29
    $region28: #{tpu_custom_call.1} parent=1 // pred_region
      %s243 = ssub.s32 128, 128
      %244 = vsyncadd [#allocation8], %s243
      %s246 = sshll.u32 [#allocation11], 4
      %s247 = int_to_ptr.vmem [resolvable:$true] %s246
      %249 = dma.vmem_to_hbm [thread:$0]  %s247, 128, %s2, [#allocation8]
    $region29: #{tpu_custom_call.1} parent=1 // pred_fallthru
      _
    // Predicated region
    $region30: #{tpu_custom_call.1} parent=1 // pred_check
      _
    $region31: #{tpu_custom_call.1} parent=1 // pred_check_branch
      %251 = sbr.rel (0) target = $region33
    $region32: #{tpu_custom_call.1} parent=1 // pred_region
      %252 = dma.done [#allocation8], 128
    $region33: #{tpu_custom_call.1} parent=1 // pred_fallthru
      _
    %253 = vsyncpa [#allocation7], 1
    %254 = vsyncpa [#allocation10], 1
    %255 = vsyncpa [#allocation8], 1

</llo_original>
